<compile_context>
chip_gen: v7x
topology: tpu7x:2x2x1
jax: 0.10.0
libtpu: 0.0.40
codegen_flags: <defaults>
</compile_context>

<pallas_src>
import functools

import jax
import jax.numpy as jnp
from jax import lax
from jax.experimental import pallas as pl
from jax.experimental.pallas import tpu as pltpu


def _round_up(x, m):
    return ((x + m - 1) // m) * m


def _avg_pool_kernel(h_ref, m_ref, inv_ref, out_ref, acc_ref, *,
                     n_total, block_n, guard_tail):
    # h_ref:   (TB, TN, TD)  embedding tile (native dtype)
    # m_ref:   (TB, TN)      lane-dense mask tile
    # inv_ref: (TB, 1)       precomputed 1/max(count, 1), f32
    # out_ref: (TB, TD)      output tile (written once, at the last N step)
    # acc_ref: (TB, TD) f32  running masked sum
    n_id = pl.program_id(2)

    @pl.when(n_id == 0)
    def _init():
        acc_ref[...] = jnp.zeros_like(acc_ref)

    h = h_ref[...]                                   # (TB, TN, TD)
    m = m_ref[...]                                   # (TB, TN)

    if guard_tail:
        # The last N block extends past N: its out-of-bounds slice holds
        # unspecified (possibly NaN/Inf) values.  Zero BOTH operands so the
        # product is exactly 0 there instead of relying on garbage * 0.
        n_left = n_total - n_id * block_n
        h = jnp.where(lax.broadcasted_iota(jnp.int32, h.shape, 1) < n_left,
                      h, jnp.zeros_like(h))
        m = jnp.where(lax.broadcasted_iota(jnp.int32, m.shape, 1) < n_left,
                      m, jnp.zeros_like(m))

    # Mask multiply on the VPU in the load dtype ({0,1} mask -> exact), then a
    # sublane-axis reduction accumulated in f32.  The (TB,TN)->(TB,TN,TD)
    # broadcast is a small mask-only relayout; the kernel is HBM-bound so all
    # of this hides under the H-tile DMA.
    mh = lax.broadcast_in_dim(m.astype(h.dtype), h.shape, (0, 1))
    acc_ref[...] += jnp.sum(h * mh, axis=1, dtype=jnp.float32)

    @pl.when(n_id == pl.num_programs(2) - 1)
    def _finalize():
        # Exact reciprocal precomputed in the wrapper (approx would risk 1e-5).
        out_ref[...] = (acc_ref[...] * inv_ref[...]).astype(out_ref.dtype)


def average_pooling(H, mask, *, block_b=None, block_n=None, block_d=None,
                    tile_budget_bytes=16 * 1024 * 1024,
                    vmem_limit_bytes=48 * 1024 * 1024):
    """H: (B, N, D) float array, mask: (B, N) float array -> (B, D)."""
    B, N, D = H.shape
    assert mask.shape == (B, N)
    itemsize = jnp.dtype(H.dtype).itemsize

    # ---- batch tile --------------------------------------------------------
    if block_b is None:
        block_b = B if B <= 8 else 8
    else:
        block_b = B if B <= 8 else max(8, (min(block_b, B) // 8) * 8)

    # ---- hidden (D) tile: second "parallel" axis so both v7x TensorCores have
    # work when the batch axis has a single tile; only lane-aligned clean splits.
    if block_d is None:
        block_d = D // 2 if (block_b >= B and D >= 256 and D % 256 == 0) else D
    assert D % block_d == 0 and (block_d == D or block_d % 128 == 0)
    d_pad = _round_up(block_d, 128)              # lane-padded width in VMEM

    # ---- node (reduction) tile, sized against the padded VMEM layout --------
    if block_n is None:
        rows = tile_budget_bytes // max(1, block_b * d_pad * itemsize)
        if rows >= N:
            block_n = N                          # single reduction step
            if B > block_b:
                # Small-N / large-B: grow the batch tile (multiple of 8) so each
                # grid step still moves a multi-MiB H tile (~0.35 us fixed cost).
                n_sub = _round_up(N, 8)
                grow = tile_budget_bytes // max(1, n_sub * d_pad * itemsize)
                block_b = int(min(512, (B // 8) * 8,
                                  max(block_b, (grow // 8) * 8)))
        else:
            block_n = max(128, (rows // 128) * 128)   # lane-dense mask blocks
    else:
        block_n = min(int(block_n), N)
        if block_n < N:
            block_n = max(128, (block_n // 128) * 128)  # mask lane constraint

    guard_tail = (N % block_n) != 0
    grid = (pl.cdiv(B, block_b), D // block_d, pl.cdiv(N, block_n))

    # Precomputed 1/max(count, 1): mask traffic is ~1/D of H traffic, so this
    # wrapper reduction is free and removes the count scratch from the kernel.
    cnt = jnp.sum(mask.astype(jnp.float32), axis=1, keepdims=True)   # (B, 1)
    inv = 1.0 / jnp.where(cnt == 0.0, 1.0, cnt)                      # (B, 1)

    kernel = functools.partial(_avg_pool_kernel, n_total=N, block_n=block_n,
                               guard_tail=guard_tail)

    out = pl.pallas_call(
        kernel,
        out_shape=jax.ShapeDtypeStruct((B, D), H.dtype),
        grid_spec=pltpu.PrefetchScalarGridSpec(
            num_scalar_prefetch=0,
            grid=grid,
            in_specs=[
                pl.BlockSpec((block_b, block_n, block_d),
                             lambda b, d, n: (b, n, d)),
                pl.BlockSpec((block_b, block_n), lambda b, d, n: (b, n)),
                pl.BlockSpec((block_b, 1), lambda b, d, n: (b, 0)),
            ],
            out_specs=pl.BlockSpec((block_b, block_d), lambda b, d, n: (b, d)),
            scratch_shapes=[pltpu.VMEM((block_b, block_d), jnp.float32)],
        ),
        compiler_params=pltpu.CompilerParams(
            dimension_semantics=("parallel", "parallel", "arbitrary"),
            vmem_limit_bytes=vmem_limit_bytes,
        ),
    )(H, mask, inv)

    # TODO(synk): for D < 128 the final store is lane-masked (vst.msk); the tail
    # is negligible for this op, so no packed output slab is emitted.
    return out


def _reference(H, mask):
    masked = H * mask[:, :, None]
    count = jnp.sum(mask, axis=1, keepdims=True)
    count = jnp.where(count == 0.0, 1.0, count)
    return jnp.sum(masked, axis=1) / count


if __name__ == "__main__":
    key = jax.random.PRNGKey(0)
    k_h, k_m, k_h2, k_m2, k_h3, k_m3 = jax.random.split(key, 6)

    # 1) Module-scale shapes: batch=2, nodes=8, hidden=32 (single grid step).
    B, N, D = 2, 8, 32
    H = jax.random.normal(k_h, (B, N, D), dtype=jnp.float32)
    mask = (jax.random.uniform(k_m, (B, N)) > 0.5).astype(jnp.float32)
    mask = mask.at[1, :].set(0.0)          # fully-masked sample exercises guard
    out = jax.block_until_ready(average_pooling(H, mask))
    assert out.shape == (B, D)
    assert jnp.allclose(out, _reference(H, mask), atol=1e-5, rtol=1e-5)

    # 2) Unaligned batch + multi-step N reduction (B tail drop + N-tail guard).
    B2, N2, D2 = 10, 300, 128
    H2 = jax.random.normal(k_h2, (B2, N2, D2), dtype=jnp.float32)
    mask2 = (jax.random.uniform(k_m2, (B2, N2)) > 0.3).astype(jnp.float32)
    out2 = jax.block_until_ready(average_pooling(H2, mask2, block_n=128))
    assert out2.shape == (B2, D2)
    assert jnp.allclose(out2, _reference(H2, mask2), atol=1e-5, rtol=1e-5)

    # 3) Small batch + wide hidden: exercises the D-parallel split (2 tiles).
    B3, N3, D3 = 2, 64, 512
    H3 = jax.random.normal(k_h3, (B3, N3, D3), dtype=jnp.float32)
    mask3 = (jax.random.uniform(k_m3, (B3, N3)) > 0.5).astype(jnp.float32)
    out3 = jax.block_until_ready(average_pooling(H3, mask3))
    assert out3.shape == (B3, D3)
    assert jnp.allclose(out3, _reference(H3, mask3), atol=1e-5, rtol=1e-5)

    print("KERNEL_OK")
</pallas_src>

<mosaic_0001>
module attributes {stable_mosaic.version = 11 : i64} {
  func.func @_avg_pool_kernel(%arg0: i32, %arg1: i32, %arg2: i32, %arg3: memref<2x8x32xf32, #tpu.memory_space<vmem>>, %arg4: memref<2x8xf32, #tpu.memory_space<vmem>>, %arg5: memref<2x1xf32, #tpu.memory_space<vmem>>, %arg6: memref<2x32xf32, #tpu.memory_space<vmem>>, %arg7: memref<2x32xf32, #tpu.memory_space<vmem>>) attributes {dimension_semantics = [#tpu.dimension_semantics<parallel>, #tpu.dimension_semantics<parallel>, #tpu.dimension_semantics<arbitrary>], iteration_bounds = array<i64: 1, 1, 1>, scalar_prefetch = 0 : i64, scratch_operands = 1 : i64, tpu.core_type = #tpu.core_type<tc>, window_params = [{transform_indices = @transform_0, window_bounds = array<i64: 2, 8, 32>}, {transform_indices = @transform_1, window_bounds = array<i64: 2, 8>}, {transform_indices = @transform_2, window_bounds = array<i64: 2, 1>}, {transform_indices = @transform_3, window_bounds = array<i64: 2, 32>}]} {
    %c0_i32 = arith.constant 0 : i32
    %0 = arith.cmpi eq, %arg2, %c0_i32 : i32
    %1 = arith.extui %0 : i1 to i32
    %c0_i32_0 = arith.constant 0 : i32
    %2 = arith.cmpi ne, %1, %c0_i32_0 : i32
    scf.if %2 {
      %cst_11 = arith.constant 0.000000e+00 : f32
      %15 = vector.broadcast %cst_11 : f32 to vector<2x32xf32>
      %c0_12 = arith.constant 0 : index
      %c0_13 = arith.constant 0 : index
      %16 = vector.load %arg7[%c0_12, %c0_13] : memref<2x32xf32, #tpu.memory_space<vmem>>, vector<2x32xf32>
      tpu.vector_store %arg7[%c0_12, %c0_13], %15 {strides = array<i32>} : memref<2x32xf32, #tpu.memory_space<vmem>>, vector<2x32xf32>,
    } else {
    }
    %c0 = arith.constant 0 : index
    %c0_1 = arith.constant 0 : index
    %c0_2 = arith.constant 0 : index
    %3 = vector.load %arg3[%c0, %c0_1, %c0_2] : memref<2x8x32xf32, #tpu.memory_space<vmem>>, vector<2x8x32xf32>
    %c0_3 = arith.constant 0 : index
    %c0_4 = arith.constant 0 : index
    %4 = vector.load %arg4[%c0_3, %c0_4] : memref<2x8xf32, #tpu.memory_space<vmem>>, vector<2x8xf32>
    %5 = vector.shape_cast %4 : vector<2x8xf32> to vector<2x8x1xf32>
    %6 = vector.broadcast %5 : vector<2x8x1xf32> to vector<2x8x32xf32>
    %c0_5 = arith.constant 0 : index
    %c0_6 = arith.constant 0 : index
    %7 = vector.load %arg7[%c0_5, %c0_6] : memref<2x32xf32, #tpu.memory_space<vmem>>, vector<2x32xf32>
    %8 = arith.mulf %3, %6 : vector<2x8x32xf32>
    %cst = arith.constant dense<0.000000e+00> : vector<2x32xf32>
    %9 = vector.multi_reduction <add>, %8, %cst [1] : vector<2x8x32xf32> to vector<2x32xf32>
    %10 = arith.addf %7, %9 : vector<2x32xf32>
    %c0_7 = arith.constant 0 : index
    %c0_8 = arith.constant 0 : index
    %11 = vector.load %arg7[%c0_7, %c0_8] : memref<2x32xf32, #tpu.memory_space<vmem>>, vector<2x32xf32>
    tpu.vector_store %arg7[%c0_7, %c0_8], %10 {strides = array<i32>} : memref<2x32xf32, #tpu.memory_space<vmem>>, vector<2x32xf32>,
    %c0_i32_9 = arith.constant 0 : i32
    %12 = arith.cmpi eq, %arg2, %c0_i32_9 : i32
    %13 = arith.extui %12 : i1 to i32
    %c0_i32_10 = arith.constant 0 : i32
    %14 = arith.cmpi ne, %13, %c0_i32_10 : i32
    scf.if %14 {
      %c0_11 = arith.constant 0 : index
      %c0_12 = arith.constant 0 : index
      %15 = vector.load %arg7[%c0_11, %c0_12] : memref<2x32xf32, #tpu.memory_space<vmem>>, vector<2x32xf32>
      %c0_13 = arith.constant 0 : index
      %c0_14 = arith.constant 0 : index
      %16 = vector.load %arg5[%c0_13, %c0_14] : memref<2x1xf32, #tpu.memory_space<vmem>>, vector<2x1xf32>
      %17 = vector.broadcast %16 : vector<2x1xf32> to vector<2x32xf32>
      %18 = arith.mulf %15, %17 : vector<2x32xf32>
      %c0_15 = arith.constant 0 : index
      %c0_16 = arith.constant 0 : index
      %19 = vector.load %arg6[%c0_15, %c0_16] : memref<2x32xf32, #tpu.memory_space<vmem>>, vector<2x32xf32>
      tpu.vector_store %arg6[%c0_15, %c0_16], %18 {strides = array<i32>} : memref<2x32xf32, #tpu.memory_space<vmem>>, vector<2x32xf32>,
    } else {
    }
    return
  }
  func.func @transform_0(%arg0: i32, %arg1: i32, %arg2: i32) -> (i32, i32, i32) {
    %c0_i32 = arith.constant 0 : i32
    return %arg0, %arg2, %arg1 : i32, i32, i32
  }
  func.func @transform_1(%arg0: i32, %arg1: i32, %arg2: i32) -> (i32, i32) {
    %c0_i32 = arith.constant 0 : i32
    return %arg0, %arg2 : i32, i32
  }
  func.func @transform_2(%arg0: i32, %arg1: i32, %arg2: i32) -> (i32, i32) {
    %c0_i32 = arith.constant 0 : i32
    %c0_i32_0 = arith.constant 0 : i32
    return %arg0, %c0_i32 : i32, i32
  }
  func.func @transform_3(%arg0: i32, %arg1: i32, %arg2: i32) -> (i32, i32) {
    %c0_i32 = arith.constant 0 : i32
    return %arg0, %arg1 : i32, i32
  }
}

</mosaic_0001>

<llo_original>
// kernel: tpu_custom_call.1
$region0: #{tpu_custom_call.1}
  #allocation0 [shape = 'u32[]', space=smem, size = 0x4, offset = 0x4, fixed_abs, tag = 'smem constant byte address 0x4 - core index']
  #allocation1 [shape = 'u32[144,128]{1,0:T(1,128)}', space=vmem, size = 0x12000, scoped, tag = 'internal scratch']
  #allocation2 [shape = 'f32[2,32]{1,0:T(2,128)}', space=vmem, size = 0x400, scoped, tag = 'scratch operand']
  %s0 = inlined_call_operand.hbm [shape: f32[2,8,32], index: 0, kind: input, shape index: {}]
  %s1 = inlined_call_operand.vmem [shape: f32[2,8], index: 1, kind: input, shape index: {}]
  %s2 = inlined_call_operand.vmem [shape: f32[2,1], index: 2, kind: input, shape index: {}]
  %s3 = inlined_call_operand.hbm [shape: f32[2,32], index: 3, kind: output, shape index: {}]
  %s4 = sld [smem:[#allocation0]]
  $region34: #{tpu_custom_call.1} parent=0
    _
  %s6 = ssub.s32 1, %s4
  %s7 = scalar_select 0, %s6, %s4
  $region1: #{tpu_custom_call.1} parent=0
    #allocation3 [shape = 'u8[8192]{0}', space=vmem, size = 0x2000, scoped, tag = 'input window, operand 0, single buffered']
    #allocation4 [shape = 's32[1]{0}', space=sflag, size = 0x4, scoped, tag = 'scoped memory for tpu_custom_call.1']
    #allocation5 [shape = 's32[1]{0}', space=sflag, size = 0x4, scoped, tag = 'scoped memory for tpu_custom_call.1']
    #allocation6 [shape = 'u8[1024]{0}', space=vmem, size = 0x400, scoped, tag = 'output window, operand 0, single buffered']
    %8 = vsyncpa [#allocation4], 0
    %9 = vsyncpa [#allocation5], 0
    // Predicated region
    $region2: #{tpu_custom_call.1} parent=1 // pred_check
      _
    $region3: #{tpu_custom_call.1} parent=1 // pred_check_branch
      %11 = sbr.rel (0) target = $region5
    $region4: #{tpu_custom_call.1} parent=1 // pred_region
      %s13 = ssub.s32 256, 256
      %14 = vsyncadd [#allocation4], %s13
      %s15 = sshll.u32 [#allocation3], 4
      %s16 = int_to_ptr.vmem [resolvable:$true] %s15
      %21 = dma.hbm_to_vmem [thread:$0]  %s0, 256, %s16, [#allocation4], 128, 128, 8
    $region5: #{tpu_custom_call.1} parent=1 // pred_fallthru
      _
    // Predicated region
    $region6: #{tpu_custom_call.1} parent=1 // pred_check
      _
    $region7: #{tpu_custom_call.1} parent=1 // pred_check_branch
      %23 = sbr.rel (0) target = $region9
    $region8: #{tpu_custom_call.1} parent=1 // pred_region
      _
    $region9: #{tpu_custom_call.1} parent=1 // pred_fallthru
      _
    // Predicated region
    $region10: #{tpu_custom_call.1} parent=1 // pred_check
      _
    $region11: #{tpu_custom_call.1} parent=1 // pred_check_branch
      %25 = sbr.rel (0) target = $region13
    $region12: #{tpu_custom_call.1} parent=1 // pred_region
      _
    $region13: #{tpu_custom_call.1} parent=1 // pred_fallthru
      _
    // Predicated region
    $region14: #{tpu_custom_call.1} parent=1 // pred_check
      _
    $region15: #{tpu_custom_call.1} parent=1 // pred_check_branch
      %27 = sbr.rel (0) target = $region17
    $region16: #{tpu_custom_call.1} parent=1 // pred_region
      %28 = dma.done [#allocation4], 256
    $region17: #{tpu_custom_call.1} parent=1 // pred_fallthru
      _
    %p29 = scmp.eq.s32.totalorder 0, 0
    // Predicated region
    $region18: #{tpu_custom_call.1} parent=1 // pred_check
      %p30 = pneg %p29
    $region19: #{tpu_custom_call.1} parent=1 // pred_check_branch
      %32 = sbr.rel (%p30) target = $region21
    $region20: #{tpu_custom_call.1} parent=1 // pred_region
      %vm33 = vcmask 254976
      %34 = vst.msk [vmem:[#allocation2] sm:$0x3] %vm33, 0.0
    $region21: #{tpu_custom_call.1} parent=1 // pred_fallthru
      _
    %v35 = vld [vmem:[#allocation3] sm:$0xff]
    %v36 = vld [vmem:[#allocation3 + $0x8] sm:$0xff]
    %v37 = vld [vmem:[%s1] sm:$0x3]
    %v38 = vlaneseq
    %v39 = vshrl.u32 %v38, 7
    %v40 = vsub.s32 0, %v39
    %v41 = vrot.slane %v37, %v40
    %43 = vbcast.lane.b32.xlu0 %v41, 256
    %v44 = vpop.permute.xlu0 %43
    %v45 = vlaneseq
    %v46 = vshrl.u32 %v45, 7
    %v47 = vsub.s32 1, %v46
    %v48 = vrot.slane %v37, %v47
    %50 = vbcast.lane.b32.xlu0 %v48, 256
    %v51 = vpop.permute.xlu0 %50
    %v52 = vld [vmem:[#allocation2] sm:$0x3]
    %v53 = vmul.f32 %v35, %v44
    %v54 = vmul.f32 %v36, %v51
    %vm55 = vcmask 261120
    %v56 = vsel %vm55, %v53, 0.0
    %v57 = vrot.slane %v56, 4
    %v58 = vadd.f32 %v56, %v57
    %v59 = vrot.slane %v58, 2
    %v60 = vadd.f32 %v58, %v59
    %v61 = vrot.slane %v60, 1
    %v62 = vadd.f32 %v60, %v61
    %v63 = vsel %vm55, %v54, 0.0
    %v64 = vrot.slane %v63, 4
    %v65 = vadd.f32 %v63, %v64
    %v66 = vrot.slane %v65, 2
    %v67 = vadd.f32 %v65, %v66
    %v68 = vrot.slane %v67, 1
    %v69 = vadd.f32 %v67, %v68
    %vm72 = vcmask 1041409
    %v73 = vsel %vm72, %v69, %v62
    %v75 = vadd.f32 %v52, %v73
    %vm76 = vcmask 254976
    %77 = vst.msk [vmem:[#allocation2] sm:$0x3] %vm76, %v75
    // Predicated region
    $region22: #{tpu_custom_call.1} parent=1 // pred_check
      %p78 = pneg %p29
    $region23: #{tpu_custom_call.1} parent=1 // pred_check_branch
      %80 = sbr.rel (%p78) target = $region25
    $region24: #{tpu_custom_call.1} parent=1 // pred_region
      %v81 = vld [vmem:[#allocation2] sm:$0x3]
      %v82 = vld [vmem:[%s2] sm:$0x3]
      %84 = vset.pattern.permute.xlu0 0
      %85 = vperm.xlu0 %84, %v82
      %v86 = vpop.permute.xlu0 %85
      %v88 = vmul.f32 %v81, %v86
      %89 = vst.msk [vmem:[#allocation6] sm:$0x3] %vm76, %v88
    $region25: #{tpu_custom_call.1} parent=1 // pred_fallthru
      _
    // Predicated region
    $region26: #{tpu_custom_call.1} parent=1 // pred_check
      _
    $region27: #{tpu_custom_call.1} parent=1 // pred_check_branch
      %91 = sbr.rel (0) target = $region29
    $region28: #{tpu_custom_call.1} parent=1 // pred_region
      %s93 = ssub.s32 32, 32
      %94 = vsyncadd [#allocation5], %s93
      %s96 = sshll.u32 [#allocation6], 4
      %s97 = int_to_ptr.vmem [resolvable:$true] %s96
      %99 = dma.vmem_to_hbm [thread:$0]  %s97, 32, %s3, [#allocation5]
    $region29: #{tpu_custom_call.1} parent=1 // pred_fallthru
      _
    // Predicated region
    $region30: #{tpu_custom_call.1} parent=1 // pred_check
      _
    $region31: #{tpu_custom_call.1} parent=1 // pred_check_branch
      %101 = sbr.rel (0) target = $region33
    $region32: #{tpu_custom_call.1} parent=1 // pred_region
      %102 = dma.done [#allocation5], 32
    $region33: #{tpu_custom_call.1} parent=1 // pred_fallthru
      _
    %103 = vsyncpa [#allocation4], 1
    %104 = vsyncpa [#allocation5], 1

</llo_original>
